<compile_context>
chip_gen: v5e
topology: v5e:2x2
jax: 0.10.0
libtpu: 0.0.40
codegen_flags: <defaults>
</compile_context>

<pallas_src>
import functools

import jax
import jax.numpy as jnp
from jax.experimental import pallas as pl
from jax.experimental.pallas import tpu as pltpu

LANES = 128
SUBLANES = 8
# Target per-block DMA size; Pallas double-buffers -> ~8 MiB of VMEM for input.
TARGET_BLOCK_BYTES = 4 * 1024 * 1024


def _pointwise(p, miu, beta, neg_inv_two_sigma_sq, eps):
    """Elementwise weighted-entropy term (plain JAX; used for the ragged tail)."""
    q = 1.0 - p
    ent = p * jnp.log(p + eps) + q * jnp.log(q + eps)
    gauss = jnp.exp((p - miu) * (p - miu) * neg_inv_two_sigma_sq) + beta
    return ent * gauss


def _weighted_entropy_kernel(p_ref, out_ref, *, miu, beta, neg_inv_two_sigma_sq,
                             eps, block_rows, tail_rows, acc_rows):
    # All grid-position queries stay at the top level of the kernel body
    # (program_id/num_programs inside pl.when branches broke interpret-mode
    # lowering in the previous version).
    i = pl.program_id(1)
    last = pl.num_programs(1) - 1

    @pl.when(i == 0)
    def _init():
        out_ref[...] = jnp.zeros_like(out_ref)

    # Upcast in-register (no-op for f32; halves HBM bytes for bf16 inputs).
    p = p_ref[...].astype(jnp.float32)                     # (block_rows, 128)
    q = 1.0 - p                                            # reused twice
    ent = p * jnp.log(p + eps) + q * jnp.log(q + eps)
    d = p - miu
    # Precomputed -1/(2*sigma^2): multiply instead of per-element divide.
    gauss = jnp.exp(d * d * neg_inv_two_sigma_sq)
    if beta != 0.0:                                        # trace-time skip
        gauss = gauss + beta
    val = ent * gauss

    def accumulate(v):
        # Groups whole (8,128) vregs: sum(axis=0) is vreg-wise VPU adds into
        # acc_rows//8 independent accumulator vregs (no cross-lane traffic,
        # shorter dependent add chains than a single (8,128) accumulator).
        out_ref[...] += v.reshape(-1, acc_rows, LANES).sum(axis=0)

    if tail_rows == block_rows:
        # Grid divides evenly: no mask work anywhere.
        accumulate(val)
    else:
        # Steady-state tiles: no mask work at all.
        @pl.when(i != last)
        def _bulk():
            accumulate(val)

        # Only the last inner tile can contain out-of-bounds garbage rows;
        # tail_rows is a Python constant, so the mask is a simple iota compare.
        @pl.when(i == last)
        def _tail():
            row = jax.lax.broadcasted_iota(jnp.int32, val.shape, 0)
            accumulate(jnp.where(row < tail_rows, val, 0.0))


def weighted_entropy_loss(p, miu=0.5, sigma=0.1, beta=0.0):
    """Pallas TPU implementation of WeightedEntropyLoss.forward (p is NCHW)."""
    N, C, H, W = p.shape
    denom = float(N * H * W)                  # PyTorch divides by N*H*W (not C)
    eps = float(jnp.finfo(jnp.float32).eps)
    miu = float(miu)
    beta = float(beta)
    neg_inv_two_sigma_sq = -1.0 / (2.0 * float(sigma) ** 2)

    flat = p.reshape(-1)                      # native dtype; kernel upcasts
    n = flat.shape[0]
    chunk = SUBLANES * LANES                  # 1024-element alignment unit
    n_main = (n // chunk) * chunk

    total = jnp.zeros((), jnp.float32)

    # Ragged tail (< 1024 elements): reduce in plain JAX. Avoids the previous
    # full-tensor jnp.pad copy and the in-kernel global-index mask.
    if n_main != n:
        tail = flat[n_main:].astype(jnp.float32)
        total = total + jnp.sum(_pointwise(tail, miu, beta,
                                           neg_inv_two_sigma_sq, eps))

    if n_main:
        main = flat if n_main == n else flat[:n_main]
        rows = n_main // LANES                # multiple of 8

        # Dtype-aware block sizing: ~4 MiB per block regardless of itemsize.
        itemsize = jnp.dtype(p.dtype).itemsize
        target_rows = max(SUBLANES,
                          (TARGET_BLOCK_BYTES // (LANES * itemsize))
                          // SUBLANES * SUBLANES)

        # 2-way outer split (both TensorCores on v7x) only when each slice
        # gets at least one full-size block; otherwise a single slice so
        # single-TC chips / small inputs pay no extra grid overhead.
        num_slices = 2 if (rows % (2 * SUBLANES) == 0
                           and rows // 2 >= target_rows) else 1
        rows_per_slice = rows // num_slices
        x = main.reshape(num_slices, rows_per_slice, LANES)   # free reshape

        block_rows = min(target_rows, rows_per_slice)          # multiple of 8
        tiles = pl.cdiv(rows_per_slice, block_rows)
        tail_rows = rows_per_slice - (tiles - 1) * block_rows  # static, in (0, block_rows]

        # Multiple independent (8,128) accumulators per slice.
        acc_groups = 1
        for g in (8, 4, 2):
            if block_rows % (g * SUBLANES) == 0:
                acc_groups = g
                break
        acc_rows = acc_groups * SUBLANES

        kernel = functools.partial(
            _weighted_entropy_kernel,
            miu=miu, beta=beta, neg_inv_two_sigma_sq=neg_inv_two_sigma_sq,
            eps=eps, block_rows=block_rows, tail_rows=tail_rows,
            acc_rows=acc_rows)

        partials = pl.pallas_call(
            kernel,
            out_shape=jax.ShapeDtypeStruct((num_slices * acc_rows, LANES),
                                           jnp.float32),
            grid_spec=pltpu.PrefetchScalarGridSpec(
                num_scalar_prefetch=0,
                grid=(num_slices, tiles),
                in_specs=[pl.BlockSpec((None, block_rows, LANES),
                                       lambda s, i: (s, i, 0))],
                out_specs=pl.BlockSpec((acc_rows, LANES),
                                       lambda s, i: (s, 0)),
            ),
            compiler_params=pltpu.CompilerParams(
                dimension_semantics=("parallel", "arbitrary"),
                vmem_limit_bytes=32 * 1024 * 1024),
        )(x)
        total = total + jnp.sum(partials)

    return -total / denom


def _reference(p, miu=0.5, sigma=0.1, beta=0.0):
    eps = jnp.finfo(jnp.float32).eps
    ent = p * jnp.log(p + eps) + (1.0 - p) * jnp.log(1.0 - p + eps)
    gauss = jnp.exp(-((p - miu) ** 2) / (2.0 * sigma ** 2)) + beta
    return -jnp.sum(ent * gauss) / (p.shape[0] * p.shape[2] * p.shape[3])


if __name__ == "__main__":
    key = jax.random.PRNGKey(0)
    # p is a probability map, NCHW
    p = jax.random.uniform(key, (2, 4, 16, 16), dtype=jnp.float32,
                           minval=0.0, maxval=1.0)

    loss = jax.block_until_ready(weighted_entropy_loss(p))

    ref = _reference(p)
    assert jnp.allclose(loss, ref, rtol=1e-5, atol=1e-5), (loss, ref)

    print("KERNEL_OK")
</pallas_src>

<mosaic_0001>
module attributes {stable_mosaic.version = 11 : i64} {
  func.func @_weighted_entropy_kernel(%arg0: i32, %arg1: i32, %arg2: memref<1x16x128xf32, #tpu.memory_space<vmem>>, %arg3: memref<16x128xf32, #tpu.memory_space<vmem>>) attributes {dimension_semantics = [#tpu.dimension_semantics<parallel>, #tpu.dimension_semantics<arbitrary>], iteration_bounds = array<i64: 1, 1>, scalar_prefetch = 0 : i64, scratch_operands = 0 : i64, tpu.core_type = #tpu.core_type<tc>, window_params = [{transform_indices = @transform_0, window_bounds = array<i64: 1, 16, 128>}, {transform_indices = @transform_1, window_bounds = array<i64: 16, 128>}]} {
    %c0_i32 = arith.constant 0 : i32
    %0 = arith.cmpi eq, %arg1, %c0_i32 : i32
    %1 = arith.extui %0 : i1 to i32
    %c0_i32_0 = arith.constant 0 : i32
    %2 = arith.cmpi ne, %1, %c0_i32_0 : i32
    scf.if %2 {
      %cst_12 = arith.constant 0.000000e+00 : f32
      %28 = vector.broadcast %cst_12 : f32 to vector<16x128xf32>
      %c0_13 = arith.constant 0 : index
      %c0_14 = arith.constant 0 : index
      %29 = vector.load %arg3[%c0_13, %c0_14] : memref<16x128xf32, #tpu.memory_space<vmem>>, vector<16x128xf32>
      tpu.vector_store %arg3[%c0_13, %c0_14], %28 {strides = array<i32>} : memref<16x128xf32, #tpu.memory_space<vmem>>, vector<16x128xf32>,
    } else {
    }
    %c0 = arith.constant 0 : index
    %c0_1 = arith.constant 0 : index
    %c0_2 = arith.constant 0 : index
    %3 = vector.load %arg2[%c0, %c0_1, %c0_2] : memref<1x16x128xf32, #tpu.memory_space<vmem>>, vector<1x16x128xf32>
    %4 = vector.shape_cast %3 : vector<1x16x128xf32> to vector<16x128xf32>
    %cst = arith.constant 1.000000e+00 : f32
    %5 = vector.broadcast %cst : f32 to vector<16x128xf32>
    %6 = arith.subf %5, %4 : vector<16x128xf32>
    %cst_3 = arith.constant 1.1920929E-7 : f32
    %7 = vector.broadcast %cst_3 : f32 to vector<16x128xf32>
    %8 = arith.addf %4, %7 : vector<16x128xf32>
    %9 = math.log %8 : vector<16x128xf32>
    %10 = arith.mulf %4, %9 : vector<16x128xf32>
    %cst_4 = arith.constant 1.1920929E-7 : f32
    %11 = vector.broadcast %cst_4 : f32 to vector<16x128xf32>
    %12 = arith.addf %6, %11 : vector<16x128xf32>
    %13 = math.log %12 : vector<16x128xf32>
    %14 = arith.mulf %6, %13 : vector<16x128xf32>
    %15 = arith.addf %10, %14 : vector<16x128xf32>
    %cst_5 = arith.constant 5.000000e-01 : f32
    %16 = vector.broadcast %cst_5 : f32 to vector<16x128xf32>
    %17 = arith.subf %4, %16 : vector<16x128xf32>
    %18 = arith.mulf %17, %17 : vector<16x128xf32>
    %cst_6 = arith.constant -5.000000e+01 : f32
    %19 = vector.broadcast %cst_6 : f32 to vector<16x128xf32>
    %20 = arith.mulf %18, %19 : vector<16x128xf32>
    %21 = math.exp %20 : vector<16x128xf32>
    %22 = arith.mulf %15, %21 : vector<16x128xf32>
    %c0_7 = arith.constant 0 : index
    %c0_8 = arith.constant 0 : index
    %23 = vector.load %arg3[%c0_7, %c0_8] : memref<16x128xf32, #tpu.memory_space<vmem>>, vector<16x128xf32>
    %24 = vector.shape_cast %22 : vector<16x128xf32> to vector<1x16x128xf32>
    %cst_9 = arith.constant dense<0.000000e+00> : vector<16x128xf32>
    %25 = vector.multi_reduction <add>, %24, %cst_9 [0] : vector<1x16x128xf32> to vector<16x128xf32>
    %26 = arith.addf %23, %25 : vector<16x128xf32>
    %c0_10 = arith.constant 0 : index
    %c0_11 = arith.constant 0 : index
    %27 = vector.load %arg3[%c0_10, %c0_11] : memref<16x128xf32, #tpu.memory_space<vmem>>, vector<16x128xf32>
    tpu.vector_store %arg3[%c0_10, %c0_11], %26 {strides = array<i32>} : memref<16x128xf32, #tpu.memory_space<vmem>>, vector<16x128xf32>,
    return
  }
  func.func @transform_0(%arg0: i32, %arg1: i32) -> (i32, i32, i32) {
    %c0_i32 = arith.constant 0 : i32
    %c0_i32_0 = arith.constant 0 : i32
    return %arg0, %arg1, %c0_i32 : i32, i32, i32
  }
  func.func @transform_1(%arg0: i32, %arg1: i32) -> (i32, i32) {
    %c0_i32 = arith.constant 0 : i32
    %c0_i32_0 = arith.constant 0 : i32
    return %arg0, %c0_i32 : i32, i32
  }
}

</mosaic_0001>

<llo_original>
// kernel: tpu_custom_call.1
$region0: #{tpu_custom_call.1}
  #allocation0 [shape = 'u32[]', space=smem, size = 0x4, offset = 0x4, fixed_abs, tag = 'smem constant byte address 0x4 - core index']
  #allocation1 [shape = 'u32[72,128]{1,0:T(1,128)}', space=vmem, size = 0x9000, scoped, tag = 'internal scratch']
  %s0 = inlined_call_operand.hbm [shape: f32[1,16,128], index: 0, kind: input, shape index: {}]
  %s1 = inlined_call_operand.hbm [shape: f32[16,128], index: 1, kind: output, shape index: {}]
  %s2 = sld [smem:[#allocation0]]
  $region22: #{tpu_custom_call.1} parent=0
    _
  %s4 = ssub.s32 1, %s2
  %s5 = scalar_select 0, %s4, %s2
  $region1: #{tpu_custom_call.1} parent=0
    #allocation2 [shape = 'u8[8192]{0}', space=vmem, size = 0x2000, scoped, tag = 'input window, operand 0, single buffered']
    #allocation3 [shape = 's32[1]{0}', space=sflag, size = 0x4, scoped, tag = 'scoped memory for tpu_custom_call.1']
    #allocation4 [shape = 's32[1]{0}', space=sflag, size = 0x4, scoped, tag = 'scoped memory for tpu_custom_call.1']
    #allocation5 [shape = 'u8[8192]{0}', space=vmem, size = 0x2000, scoped, tag = 'output window, operand 0, single buffered']
    %6 = vsyncpa [#allocation3], 0
    %7 = vsyncpa [#allocation4], 0
    // Predicated region
    $region2: #{tpu_custom_call.1} parent=1 // pred_check
      _
    $region3: #{tpu_custom_call.1} parent=1 // pred_check_branch
      %9 = sbr.rel (0) target = $region5
    $region4: #{tpu_custom_call.1} parent=1 // pred_region
      %11 = vsyncadd [#allocation3], 0
      %s12 = sshll.u32 %s0, 4
      %s13 = int_to_ptr.hbm [resolvable:$true] %s12
      %s14 = sshll.u32 [#allocation2], 4
      %s15 = int_to_ptr.vmem [resolvable:$true] %s14
      %20 = dma.hbm_to_vmem [thread:$0]  %s13, 256, %s15, [#allocation3], 128, 128, 8
    $region5: #{tpu_custom_call.1} parent=1 // pred_fallthru
      _
    // Predicated region
    $region6: #{tpu_custom_call.1} parent=1 // pred_check
      _
    $region7: #{tpu_custom_call.1} parent=1 // pred_check_branch
      %22 = sbr.rel (0) target = $region9
    $region8: #{tpu_custom_call.1} parent=1 // pred_region
      %24 = dma.done [#allocation3], 256
    $region9: #{tpu_custom_call.1} parent=1 // pred_fallthru
      _
    %p25 = scmp.eq.s32.totalorder 0, 0
    // Predicated region
    $region10: #{tpu_custom_call.1} parent=1 // pred_check
      %p26 = pneg %p25
    $region11: #{tpu_custom_call.1} parent=1 // pred_check_branch
      %28 = sbr.rel (%p26) target = $region13
    $region12: #{tpu_custom_call.1} parent=1 // pred_region
      %29 = vst [vmem:[#allocation5] sm:$0xff] 0.0
      %30 = vst [vmem:[#allocation5 + $0x8] sm:$0xff] 0.0
    $region13: #{tpu_custom_call.1} parent=1 // pred_fallthru
      _
    %v31 = vld [vmem:[#allocation2] sm:$0xff]
    %v32 = vld [vmem:[#allocation2 + $0x8] sm:$0xff]
    %v33 = vsub.f32 1.0, %v31
    %v34 = vsub.f32 1.0, %v32
    %v35 = vadd.f32 %v31, 1.1920929e-07
    %v36 = vadd.f32 %v32, 1.1920929e-07
    %v37 = vlog2.pop %v35
    %v38 = vmul.f32 %v37, 0.6931472
    %v39 = vlog2.pop %v36
    %v40 = vmul.f32 %v39, 0.6931472
    %v41 = vmul.f32 %v31, %v38
    %v42 = vmul.f32 %v32, %v40
    %v43 = vadd.f32 %v33, 1.1920929e-07
    %v44 = vadd.f32 %v34, 1.1920929e-07
    %v45 = vlog2.pop %v43
    %v46 = vmul.f32 %v45, 0.6931472
    %v47 = vlog2.pop %v44
    %v48 = vmul.f32 %v47, 0.6931472
    %v49 = vmul.f32 %v33, %v46
    %v50 = vmul.f32 %v34, %v48
    %v51 = vadd.f32 %v41, %v49
    %v52 = vadd.f32 %v42, %v50
    %v53 = vsub.f32 %v31, 0.5
    %v54 = vsub.f32 %v32, 0.5
    %v55 = vmul.f32 %v53, %v53
    %v56 = vmul.f32 %v54, %v54
    %v57 = vmul.f32 %v55, -50.0
    %v58 = vmul.f32 %v56, -50.0
    %v59 = vmul.f32 %v57, 1.442695
    %v60 = vpow.pop %v59
    %v61 = vmul.f32 %v58, 1.442695
    %v62 = vpow.pop %v61
    %v63 = vmul.f32 %v51, %v60
    %v64 = vmul.f32 %v52, %v62
    %v65 = vld [vmem:[#allocation5] sm:$0xff]
    %v66 = vld [vmem:[#allocation5 + $0x8] sm:$0xff]
    %v67 = vadd.f32 %v63, 0.0
    %v68 = vadd.f32 %v64, 0.0
    %v69 = vadd.f32 %v65, %v67
    %v70 = vadd.f32 %v66, %v68
    %71 = vst [vmem:[#allocation5] sm:$0xff] %v69
    %72 = vst [vmem:[#allocation5 + $0x8] sm:$0xff] %v70
    // Predicated region
    $region14: #{tpu_custom_call.1} parent=1 // pred_check
      _
    $region15: #{tpu_custom_call.1} parent=1 // pred_check_branch
      %74 = sbr.rel (0) target = $region17
    $region16: #{tpu_custom_call.1} parent=1 // pred_region
      %76 = vsyncadd [#allocation4], 0
      %s77 = sshll.u32 [#allocation5], 4
      %s78 = int_to_ptr.vmem [resolvable:$true] %s77
      %s79 = sshll.u32 %s1, 4
      %s80 = int_to_ptr.hbm [resolvable:$true] %s79
      %85 = dma.vmem_to_hbm [thread:$0]  %s78, 256, %s80, [#allocation4], 128, 128, 8
    $region17: #{tpu_custom_call.1} parent=1 // pred_fallthru
      _
    // Predicated region
    $region18: #{tpu_custom_call.1} parent=1 // pred_check
      _
    $region19: #{tpu_custom_call.1} parent=1 // pred_check_branch
      %87 = sbr.rel (0) target = $region21
    $region20: #{tpu_custom_call.1} parent=1 // pred_region
      %89 = dma.done [#allocation4], 256
    $region21: #{tpu_custom_call.1} parent=1 // pred_fallthru
      _
    %90 = vsyncpa [#allocation3], 1
    %91 = vsyncpa [#allocation4], 1

</llo_original>
